<compile_context>
chip_gen: v7x
topology: tpu7x:2x2x1
jax: 0.10.0
libtpu: 0.0.40
codegen_flags: <defaults>
</compile_context>

<pallas_src>
import functools

import jax
import jax.numpy as jnp
from jax.experimental import pallas as pl
from jax.experimental.pallas import tpu as pltpu


def _round_up(x, m):
    return (x + m - 1) // m * m


def _mlp_kernel(x_ref, wp_ref, bp_ref, o_ref, *, feat):
    # x: (TB, F) in compute dtype; weight pack wp: (104, max(F,64)) compute dtype
    #   rows [0:64, 0:F]  = layer1 weight (out,in) = (64, F)
    #   rows [64:96,0:64] = layer2 weight (32, 64)
    #   rows [96:97,0:32] = layer3 weight (1, 32)
    # bias pack bp: (104, 1) f32: rows 0:64 = b1, 64:96 = b2, 96 = b3.
    x = x_ref[...]                                            # (TB, F)

    # Layer 1: (64,F) . (TB,F)^T -> (64, TB); MXU latches the x chunk transposed,
    # so no explicit data transpose is needed. f32 accumulation.
    w1t = wp_ref[0:64, 0:feat]
    h1 = jax.lax.dot_general(w1t, x, dimension_numbers=(((1,), (1,)), ((), ())),
                             preferred_element_type=jnp.float32)
    h1 = jnp.maximum(h1 + bp_ref[0:64, :], 0.0)               # (64, TB), lane-dense VPU work
    # Dropout(p=0.2): identity at inference.

    # Layer 2: (32,64) . (64,TB) -> (32, TB), standard MXU orientation.
    w2t = wp_ref[64:96, 0:64]
    h2 = jax.lax.dot_general(w2t, h1.astype(w2t.dtype),
                             dimension_numbers=(((1,), (0,)), ((), ())),
                             preferred_element_type=jnp.float32)
    h2 = jnp.maximum(h2 + bp_ref[64:96, :], 0.0)              # (32, TB)
    # Dropout(p=0.2): identity at inference.

    # Layer 3: (1,32) . (32,TB) -> (1, TB): lane-dense, unmasked output stores.
    w3 = wp_ref[96:97, 0:32]
    out = jax.lax.dot_general(w3, h2.astype(w3.dtype),
                              dimension_numbers=(((1,), (0,)), ((), ())),
                              preferred_element_type=jnp.float32)
    o_ref[...] = (out + bp_ref[96:97, :]).astype(o_ref.dtype)


def car_price_predictor(x, params, *, compute_dtype=jnp.bfloat16, block_b=None):
    """Forward pass of CarPricePredictor.

    x: (B, F) float32. params: PyTorch-layout dict (see init_params).
    compute_dtype: jnp.bfloat16 (default; halves HBM traffic, f32 accumulation) or
                   jnp.float32 (exact PyTorch parity).
    block_b: optional cap on the batch tile (rounded down to a multiple of 128).
    """
    w1, b1 = params["w1"], params["b1"]   # (64, F), (64,)
    w2, b2 = params["w2"], params["b2"]   # (32, 64), (32,)
    w3, b3 = params["w3"], params["b3"]   # (1, 32), (1,)

    B, F = x.shape
    assert w1.shape == (64, F), (w1.shape, F)
    isz = jnp.dtype(compute_dtype).itemsize

    x_c = x.astype(compute_dtype)

    # ---- Fused weight pack (compute dtype) and bias pack (f32), both VMEM-resident. ----
    wp_width = max(F, 64)
    wp = jnp.zeros((104, wp_width), compute_dtype)
    wp = wp.at[0:64, 0:F].set(w1.astype(compute_dtype))
    wp = wp.at[64:96, 0:64].set(w2.astype(compute_dtype))
    wp = wp.at[96:97, 0:32].set(w3.astype(compute_dtype))
    bp = jnp.zeros((104, 1), jnp.float32)
    bp = bp.at[0:64, 0].set(b1.astype(jnp.float32))
    bp = bp.at[64:96, 0].set(b2.astype(jnp.float32))
    bp = bp.at[96:97, 0].set(b3.astype(jnp.float32))

    # ---- Batch tile sized against the lane-padded VMEM footprint, per generation. ----
    try:
        vmem_cap = int(pltpu.get_tpu_info().vmem_capacity_bytes)
    except Exception:
        vmem_cap = 64 * 1024 * 1024          # conservative (v7x-sized) fallback
    vmem_limit = int(min((vmem_cap * 3) // 4, 96 * 1024 * 1024))   # ~48 MiB v7x, 96 MiB v5e/v6e

    lane_f = _round_up(F, 128)
    per_row = (2 * lane_f * isz              # double-buffered x tile (lane-padded)
               + (64 + 32) * 4               # f32 h1/h2 accumulators
               + (64 + 32) * isz             # low-precision copies feeding the next matmul
               + 2 * 8 * 4)                  # double-buffered (1, TB) output (sublane-padded)
    tile_budget = vmem_limit * 2 // 3        # leave headroom for weights + compiler temps
    tb_cap = max(128, (tile_budget // per_row) // 128 * 128)
    tb_cap = min(tb_cap, 32768)              # bound padding waste / intermediate size
    if block_b is not None:
        tb_cap = min(tb_cap, max(128, (block_b // 128) * 128))

    b128 = _round_up(B, 128)
    tb = min(tb_cap, b128)
    if b128 >= 256:
        # v7x megacore: keep >= 2 grid steps so both TensorCores get work.
        tb = min(tb, _round_up(pl.cdiv(b128, 2), 128))
    tb = max(tb, 128)

    b_pad = _round_up(B, tb)
    if b_pad != B:
        x_c = jnp.pad(x_c, ((0, b_pad - B), (0, 0)))
    num_tiles = b_pad // tb

    cost = pl.CostEstimate(
        flops=2 * b_pad * (F * 64 + 64 * 32 + 32),
        transcendentals=0,
        bytes_accessed=b_pad * F * isz + wp.size * isz + bp.size * 4 + b_pad * 4,
    )

    out = pl.pallas_call(
        functools.partial(_mlp_kernel, feat=F),
        out_shape=jax.ShapeDtypeStruct((1, b_pad), jnp.float32),
        grid=(num_tiles,),
        in_specs=[
            pl.BlockSpec((tb, F), lambda i: (i, 0)),        # x: tiled over batch
            pl.BlockSpec(wp.shape, lambda i: (0, 0)),       # weight pack: resident
            pl.BlockSpec(bp.shape, lambda i: (0, 0)),       # bias pack: resident
        ],
        out_specs=pl.BlockSpec((1, tb), lambda i: (0, i)),  # lane-dense output slab
        compiler_params=pltpu.CompilerParams(
            dimension_semantics=("parallel",),              # megacore sharding on v7x
            vmem_limit_bytes=vmem_limit,
        ),
        cost_estimate=cost,
    )(x_c, wp, bp)

    # (1, B_pad) lane-dense slab -> (B, 1); padded rows dropped.
    return out[0, :B].reshape(B, 1).astype(jnp.float32)


def init_params(key, input_size):
    """PyTorch-layout parameters: nn.Linear(in, out) -> weight (out, in), bias (out,)."""
    ks = jax.random.split(key, 6)

    def linear(kw, kb, fan_in, fan_out):
        bound = fan_in ** -0.5
        w = jax.random.uniform(kw, (fan_out, fan_in), jnp.float32, -bound, bound)
        b = jax.random.uniform(kb, (fan_out,), jnp.float32, -bound, bound)
        return w, b

    w1, b1 = linear(ks[0], ks[1], input_size, 64)
    w2, b2 = linear(ks[2], ks[3], 64, 32)
    w3, b3 = linear(ks[4], ks[5], 32, 1)
    return {"w1": w1, "b1": b1, "w2": w2, "b2": b2, "w3": w3, "b3": b3}


def _reference(x, p):
    h1 = jnp.maximum(x @ p["w1"].T + p["b1"], 0.0)
    h2 = jnp.maximum(h1 @ p["w2"].T + p["b2"], 0.0)
    return h2 @ p["w3"].T + p["b3"]


if __name__ == "__main__":
    key = jax.random.PRNGKey(0)
    k_x, k_p, k_x2 = jax.random.split(key, 3)

    batch, input_size = 8, 16
    x = jax.random.normal(k_x, (batch, input_size), dtype=jnp.float32)
    params = init_params(k_p, input_size)

    # Exact f32 parity path (single tile).
    out = jax.block_until_ready(car_price_predictor(x, params, compute_dtype=jnp.float32))
    ref = _reference(x, params)
    assert out.shape == (batch, 1), out.shape
    assert jnp.allclose(out, ref, atol=1e-5, rtol=1e-5), "mismatch vs reference (small batch)"

    # Multi-tile grid + batch padding (B=260, block_b=128 -> 3 tiles), still exact f32.
    batch2 = 260
    x2 = jax.random.normal(k_x2, (batch2, input_size), dtype=jnp.float32)
    out2 = jax.block_until_ready(
        car_price_predictor(x2, params, compute_dtype=jnp.float32, block_b=128))
    ref2 = _reference(x2, params)
    assert out2.shape == (batch2, 1), out2.shape
    assert jnp.allclose(out2, ref2, atol=1e-5, rtol=1e-5), "mismatch vs reference (tiled batch)"

    # Default bf16-x fast path (auto TB, >=2 tiles for megacore); looser tolerance.
    out3 = jax.block_until_ready(car_price_predictor(x2, params))
    assert out3.shape == (batch2, 1), out3.shape
    assert jnp.allclose(out3, ref2, atol=5e-2, rtol=5e-2), "mismatch vs reference (bf16 path)"

    print("KERNEL_OK")
</pallas_src>

<mosaic_0001>
module attributes {stable_mosaic.version = 11 : i64} {
  func.func @_mlp_kernel(%arg0: i32, %arg1: memref<128x16xf32, #tpu.memory_space<vmem>>, %arg2: memref<104x64xf32, #tpu.memory_space<vmem>>, %arg3: memref<104x1xf32, #tpu.memory_space<vmem>>, %arg4: memref<1x128xf32, #tpu.memory_space<vmem>>) attributes {dimension_semantics = [#tpu.dimension_semantics<parallel>], iteration_bounds = array<i64: 1>, scalar_prefetch = 0 : i64, scratch_operands = 0 : i64, tpu.core_type = #tpu.core_type<tc>, window_params = [{transform_indices = @transform_0, window_bounds = array<i64: 128, 16>}, {pipeline_mode = #tpu.pipeline_mode<synchronous>, transform_indices = @transform_1, window_bounds = array<i64: 104, 64>}, {pipeline_mode = #tpu.pipeline_mode<synchronous>, transform_indices = @transform_2, window_bounds = array<i64: 104, 1>}, {transform_indices = @transform_3, window_bounds = array<i64: 1, 128>}]} {
    %c0 = arith.constant 0 : index
    %c0_0 = arith.constant 0 : index
    %0 = vector.load %arg1[%c0, %c0_0] : memref<128x16xf32, #tpu.memory_space<vmem>>, vector<128x16xf32>
    %c0_1 = arith.constant 0 : index
    %c0_2 = arith.constant 0 : index
    %1 = vector.load %arg2[%c0_1, %c0_2] : memref<104x64xf32, #tpu.memory_space<vmem>>, vector<64x16xf32>
    %cst = arith.constant dense<0.000000e+00> : vector<64x128xf32>
    %2 = tpu.matmul %1, %0, %cst {dimension_numbers = #tpu.dot_dimension_numbers<[1], [1], [0], [0], [0, 0, 1, 0], [], []>} : vector<64x16xf32>, vector<128x16xf32>, vector<64x128xf32> -> vector<64x128xf32>
    %c0_3 = arith.constant 0 : index
    %c0_4 = arith.constant 0 : index
    %3 = vector.load %arg3[%c0_3, %c0_4] : memref<104x1xf32, #tpu.memory_space<vmem>>, vector<64x1xf32>
    %4 = vector.broadcast %3 : vector<64x1xf32> to vector<64x128xf32>
    %5 = arith.addf %2, %4 : vector<64x128xf32>
    %cst_5 = arith.constant 0.000000e+00 : f32
    %6 = vector.broadcast %cst_5 : f32 to vector<64x128xf32>
    %7 = arith.maximumf %5, %6 : vector<64x128xf32>
    %c64 = arith.constant 64 : index
    %c0_6 = arith.constant 0 : index
    %8 = vector.load %arg2[%c64, %c0_6] : memref<104x64xf32, #tpu.memory_space<vmem>>, vector<32x64xf32>
    %cst_7 = arith.constant dense<0.000000e+00> : vector<32x128xf32>
    %9 = tpu.matmul %8, %7, %cst_7 {dimension_numbers = #tpu.dot_dimension_numbers<[1], [0], [0], [1], [0, 0, 1, 1], [], []>} : vector<32x64xf32>, vector<64x128xf32>, vector<32x128xf32> -> vector<32x128xf32>
    %c64_8 = arith.constant 64 : index
    %c0_9 = arith.constant 0 : index
    %10 = vector.load %arg3[%c64_8, %c0_9] : memref<104x1xf32, #tpu.memory_space<vmem>>, vector<32x1xf32>
    %11 = vector.broadcast %10 : vector<32x1xf32> to vector<32x128xf32>
    %12 = arith.addf %9, %11 : vector<32x128xf32>
    %cst_10 = arith.constant 0.000000e+00 : f32
    %13 = vector.broadcast %cst_10 : f32 to vector<32x128xf32>
    %14 = arith.maximumf %12, %13 : vector<32x128xf32>
    %c96 = arith.constant 96 : index
    %c0_11 = arith.constant 0 : index
    %15 = vector.load %arg2[%c96, %c0_11] : memref<104x64xf32, #tpu.memory_space<vmem>>, vector<1x32xf32>
    %cst_12 = arith.constant dense<0.000000e+00> : vector<1x128xf32>
    %16 = tpu.matmul %15, %14, %cst_12 {dimension_numbers = #tpu.dot_dimension_numbers<[1], [0], [0], [1], [0, 0, 1, 1], [], []>} : vector<1x32xf32>, vector<32x128xf32>, vector<1x128xf32> -> vector<1x128xf32>
    %c96_13 = arith.constant 96 : index
    %c0_14 = arith.constant 0 : index
    %17 = vector.load %arg3[%c96_13, %c0_14] : memref<104x1xf32, #tpu.memory_space<vmem>>, vector<1x1xf32>
    %18 = vector.broadcast %17 : vector<1x1xf32> to vector<1x128xf32>
    %19 = arith.addf %16, %18 : vector<1x128xf32>
    %c0_15 = arith.constant 0 : index
    %c0_16 = arith.constant 0 : index
    %20 = vector.load %arg4[%c0_15, %c0_16] : memref<1x128xf32, #tpu.memory_space<vmem>>, vector<1x128xf32>
    tpu.vector_store %arg4[%c0_15, %c0_16], %19 {strides = array<i32>} : memref<1x128xf32, #tpu.memory_space<vmem>>, vector<1x128xf32>,
    return
  }
  func.func @transform_0(%arg0: i32) -> (i32, i32) {
    %c0_i32 = arith.constant 0 : i32
    %c0_i32_0 = arith.constant 0 : i32
    return %arg0, %c0_i32 : i32, i32
  }
  func.func @transform_1(%arg0: i32) -> (i32, i32) {
    %c0_i32 = arith.constant 0 : i32
    %c0_i32_0 = arith.constant 0 : i32
    %c0_i32_1 = arith.constant 0 : i32
    return %c0_i32, %c0_i32_0 : i32, i32
  }
  func.func @transform_2(%arg0: i32) -> (i32, i32) {
    %c0_i32 = arith.constant 0 : i32
    %c0_i32_0 = arith.constant 0 : i32
    %c0_i32_1 = arith.constant 0 : i32
    return %c0_i32, %c0_i32_0 : i32, i32
  }
  func.func @transform_3(%arg0: i32) -> (i32, i32) {
    %c0_i32 = arith.constant 0 : i32
    %c0_i32_0 = arith.constant 0 : i32
    return %c0_i32, %arg0 : i32, i32
  }
}

</mosaic_0001>

<llo_original>
// kernel: tpu_custom_call.1
$region0: #{tpu_custom_call.1}
  #allocation0 [shape = 'u32[]', space=smem, size = 0x4, offset = 0x4, fixed_abs, tag = 'smem constant byte address 0x4 - core index']
  #allocation1 [shape = 'u32[144,128]{1,0:T(1,128)}', space=vmem, size = 0x12000, scoped, tag = 'internal scratch']
  %s0 = inlined_call_operand.vmem [shape: f32[128,16], index: 0, kind: input, shape index: {}]
  %s1 = inlined_call_operand.vmem [shape: f32[104,64], index: 1, kind: input, shape index: {}]
  %s2 = inlined_call_operand.vmem [shape: f32[104,1], index: 2, kind: input, shape index: {}]
  %s3 = inlined_call_operand.hbm [shape: f32[1,128], index: 3, kind: output, shape index: {}]
  %s4 = sld [smem:[#allocation0]]
  $region22: #{tpu_custom_call.1} parent=0
    _
  %s6 = ssub.s32 1, %s4
  %s7 = scalar_select 0, %s6, %s4
  $region1: #{tpu_custom_call.1} parent=0
    #allocation2 [shape = 'u8[512]{0}', space=vmem, size = 0x400, scoped, tag = 'output window, operand 0, single buffered']
    #allocation3 [shape = 's32[1]{0}', space=sflag, size = 0x4, scoped, tag = 'scoped memory for tpu_custom_call.1']
    %8 = vsyncpa [#allocation3], 0
    // Predicated region
    $region2: #{tpu_custom_call.1} parent=1 // pred_check
      _
    $region3: #{tpu_custom_call.1} parent=1 // pred_check_branch
      %10 = sbr.rel (0) target = $region5
    $region4: #{tpu_custom_call.1} parent=1 // pred_region
      _
    $region5: #{tpu_custom_call.1} parent=1 // pred_fallthru
      _
    // Predicated region
    $region6: #{tpu_custom_call.1} parent=1 // pred_check
      _
    $region7: #{tpu_custom_call.1} parent=1 // pred_check_branch
      %12 = sbr.rel (0) target = $region9
    $region8: #{tpu_custom_call.1} parent=1 // pred_region
      _
    $region9: #{tpu_custom_call.1} parent=1 // pred_fallthru
      _
    // Predicated region
    $region10: #{tpu_custom_call.1} parent=1 // pred_check
      _
    $region11: #{tpu_custom_call.1} parent=1 // pred_check_branch
      %14 = sbr.rel (0) target = $region13
    $region12: #{tpu_custom_call.1} parent=1 // pred_region
      _
    $region13: #{tpu_custom_call.1} parent=1 // pred_fallthru
      _
    %v15 = vld [vmem:[%s0] sm:$0xff]
    %v16 = vld [vmem:[%s0 + $0x8] sm:$0xff]
    %v17 = vld [vmem:[%s0 + $0x10] sm:$0xff]
    %v18 = vld [vmem:[%s0 + $0x18] sm:$0xff]
    %v19 = vld [vmem:[%s0 + $0x20] sm:$0xff]
    %v20 = vld [vmem:[%s0 + $0x28] sm:$0xff]
    %v21 = vld [vmem:[%s0 + $0x30] sm:$0xff]
    %v22 = vld [vmem:[%s0 + $0x38] sm:$0xff]
    %v23 = vld [vmem:[%s0 + $0x40] sm:$0xff]
    %v24 = vld [vmem:[%s0 + $0x48] sm:$0xff]
    %v25 = vld [vmem:[%s0 + $0x50] sm:$0xff]
    %v26 = vld [vmem:[%s0 + $0x58] sm:$0xff]
    %v27 = vld [vmem:[%s0 + $0x60] sm:$0xff]
    %v28 = vld [vmem:[%s0 + $0x68] sm:$0xff]
    %v29 = vld [vmem:[%s0 + $0x70] sm:$0xff]
    %v30 = vld [vmem:[%s0 + $0x78] sm:$0xff]
    %v31 = vld [vmem:[%s1] sm:$0xff]
    %v32 = vld [vmem:[%s1 + $0x8] sm:$0xff]
    %v33 = vld [vmem:[%s1 + $0x10] sm:$0xff]
    %v34 = vld [vmem:[%s1 + $0x18] sm:$0xff]
    %v35 = vld [vmem:[%s1 + $0x20] sm:$0xff]
    %v36 = vld [vmem:[%s1 + $0x28] sm:$0xff]
    %v37 = vld [vmem:[%s1 + $0x30] sm:$0xff]
    %v38 = vld [vmem:[%s1 + $0x38] sm:$0xff]
    %v39 = vld [vmem:[%s2] sm:$0xff]
    %v40 = vld [vmem:[%s2 + $0x8] sm:$0xff]
    %v41 = vld [vmem:[%s2 + $0x10] sm:$0xff]
    %v42 = vld [vmem:[%s2 + $0x18] sm:$0xff]
    %v43 = vld [vmem:[%s2 + $0x20] sm:$0xff]
    %v44 = vld [vmem:[%s2 + $0x28] sm:$0xff]
    %v45 = vld [vmem:[%s2 + $0x30] sm:$0xff]
    %v46 = vld [vmem:[%s2 + $0x38] sm:$0xff]
    %48 = vset.pattern.permute.xlu0 0
    %49 = vperm.xlu0 %48, %v39
    %v50 = vpop.permute.xlu0 %49
    %53 = vset.pattern.permute.xlu0 0
    %54 = vperm.xlu0 %53, %v40
    %v55 = vpop.permute.xlu0 %54
    %58 = vset.pattern.permute.xlu0 0
    %59 = vperm.xlu0 %58, %v41
    %v60 = vpop.permute.xlu0 %59
    %63 = vset.pattern.permute.xlu0 0
    %64 = vperm.xlu0 %63, %v42
    %v65 = vpop.permute.xlu0 %64
    %68 = vset.pattern.permute.xlu0 0
    %69 = vperm.xlu0 %68, %v43
    %v70 = vpop.permute.xlu0 %69
    %73 = vset.pattern.permute.xlu0 0
    %74 = vperm.xlu0 %73, %v44
    %v75 = vpop.permute.xlu0 %74
    %78 = vset.pattern.permute.xlu0 0
    %79 = vperm.xlu0 %78, %v45
    %v80 = vpop.permute.xlu0 %79
    %83 = vset.pattern.permute.xlu0 0
    %84 = vperm.xlu0 %83, %v46
    %v85 = vpop.permute.xlu0 %84
    %vm87 = vcmask 130048
    %v89 = vsel %vm87, %v31, 0
    %v92 = vsel %vm87, %v32, 0
    %v95 = vsel %vm87, %v33, 0
    %v98 = vsel %vm87, %v34, 0
    %v101 = vsel %vm87, %v35, 0
    %v104 = vsel %vm87, %v36, 0
    %v107 = vsel %vm87, %v37, 0
    %v110 = vsel %vm87, %v38, 0
    %v113 = vsel %vm87, %v15, 0
    %v116 = vsel %vm87, %v16, 0
    %v119 = vsel %vm87, %v17, 0
    %v122 = vsel %vm87, %v18, 0
    %v125 = vsel %vm87, %v19, 0
    %v128 = vsel %vm87, %v20, 0
    %v131 = vsel %vm87, %v21, 0
    %v134 = vsel %vm87, %v22, 0
    %v137 = vsel %vm87, %v23, 0
    %v140 = vsel %vm87, %v24, 0
    %v143 = vsel %vm87, %v25, 0
    %v146 = vsel %vm87, %v26, 0
    %v149 = vsel %vm87, %v27, 0
    %v152 = vsel %vm87, %v28, 0
    %v155 = vsel %vm87, %v29, 0
    %v158 = vsel %vm87, %v30, 0
    %160 = vmatprep.subr.mxu0 0.0
    %161 = vmatpush1.xpose.msra.mxu0 %v113
    %162 = vmatprep.subr.mxu0 0.0
    %163 = vmatpush1.xpose.msra.mxu0 %v116
    %164 = vmatprep.subr.mxu0 0.0
    %165 = vmatpush1.xpose.msra.mxu0 %v119
    %166 = vmatprep.subr.mxu0 0.0
    %167 = vmatpush1.xpose.msra.mxu0 %v122
    %168 = vmatprep.subr.mxu0 0.0
    %169 = vmatpush1.xpose.msra.mxu0 %v125
    %170 = vmatprep.subr.mxu0 0.0
    %171 = vmatpush1.xpose.msra.mxu0 %v128
    %172 = vmatprep.subr.mxu0 0.0
    %173 = vmatpush1.xpose.msra.mxu0 %v131
    %174 = vmatprep.subr.mxu0 0.0
    %175 = vmatpush1.xpose.msra.mxu0 %v134
    %176 = vmatprep.subr.mxu0 0.0
    %177 = vmatpush1.xpose.msra.mxu0 %v137
    %178 = vmatprep.subr.mxu0 0.0
    %179 = vmatpush1.xpose.msra.mxu0 %v140
    %180 = vmatprep.subr.mxu0 0.0
    %181 = vmatpush1.xpose.msra.mxu0 %v143
    %182 = vmatprep.subr.mxu0 0.0
    %183 = vmatpush1.xpose.msra.mxu0 %v146
    %184 = vmatprep.subr.mxu0 0.0
    %185 = vmatpush1.xpose.msra.mxu0 %v149
    %186 = vmatprep.subr.mxu0 0.0
    %187 = vmatpush1.xpose.msra.mxu0 %v152
    %188 = vmatprep.subr.mxu0 0.0
    %189 = vmatpush1.xpose.msra.mxu0 %v155
    %190 = vmatprep.subr.mxu0 0.0
    %191 = vmatpush1.xpose.msra.mxu0 %v158
    %192 = vmatprep.subr.mxu0 0.0
    %193 = vmatpush1.xpose.msra.mxu0 0.0
    %194 = vmatprep.subr.mxu0 0.0
    %195 = vmatpush1.xpose.msra.mxu0 0.0
    %196 = vmatprep.subr.mxu0 0.0
    %197 = vmatpush1.xpose.msra.mxu0 0.0
    %198 = vmatprep.subr.mxu0 0.0
    %199 = vmatpush1.xpose.msra.mxu0 0.0
    %200 = vmatprep.subr.mxu0 0.0
    %201 = vmatpush1.xpose.msra.mxu0 0.0
    %202 = vmatprep.subr.mxu0 0.0
    %203 = vmatpush1.xpose.msra.mxu0 0.0
    %204 = vmatprep.subr.mxu0 0.0
    %205 = vmatpush1.xpose.msra.mxu0 0.0
    %206 = vmatprep.subr.mxu0 0.0
    %207 = vmatpush1.xpose.msra.mxu0 0.0
    %208 = vmatprep.subr.mxu0 0.0
    %209 = vmatpush1.xpose.msra.mxu0 0.0
    %210 = vmatprep.subr.mxu0 0.0
    %211 = vmatpush1.xpose.msra.mxu0 0.0
    %212 = vmatprep.subr.mxu0 0.0
    %213 = vmatpush1.xpose.msra.mxu0 0.0
    %214 = vmatprep.subr.mxu0 0.0
    %215 = vmatpush1.xpose.msra.mxu0 0.0
    %216 = vmatprep.subr.mxu0 0.0
    %217 = vmatpush1.xpose.msra.mxu0 0.0
    %218 = vmatprep.subr.mxu0 0.0
    %219 = vmatpush1.xpose.msra.mxu0 0.0
    %220 = vmatprep.subr.mxu0 0.0
    %221 = vmatpush1.xpose.msra.mxu0 0.0
    %222 = vmatprep.subr.mxu0 0.0
    %223 = vmatpush1.xpose.msra.mxu0 0.0
    %224 = vmatprep.mubr.f32.mxu0 0.0
    %225 = vmatmul.mubr.f32.gmra.mrb[0].mxu0 %v89
    %v226 = vpop.f32.mrb[0].mxu0
    %v227 = vadd.f32 %v50, %v226
    %v228 = vpop.f32.mrb[0].mxu0
    %229 = vmatprep.mubr.f32.mxu0 0.0
    %230 = vmatmul.mubr.f32.gmra.mrb[0].mxu0 %v92
    %v231 = vpop.f32.mrb[0].mxu0
    %v232 = vadd.f32 %v55, %v231
    %v233 = vpop.f32.mrb[0].mxu0
    %234 = vmatprep.mubr.f32.mxu0 0.0
    %235 = vmatmul.mubr.f32.gmra.mrb[0].mxu0 %v95
    %v236 = vpop.f32.mrb[0].mxu0
    %v237 = vadd.f32 %v60, %v236
    %v238 = vpop.f32.mrb[0].mxu0
    %239 = vmatprep.mubr.f32.mxu0 0.0
    %240 = vmatmul.mubr.f32.gmra.mrb[0].mxu0 %v98
    %v241 = vpop.f32.mrb[0].mxu0
    %v242 = vadd.f32 %v65, %v241
    %v243 = vpop.f32.mrb[0].mxu0
    %244 = vmatprep.mubr.f32.mxu0 0.0
    %245 = vmatmul.mubr.f32.gmra.mrb[0].mxu0 %v101
    %v246 = vpop.f32.mrb[0].mxu0
    %v247 = vadd.f32 %v70, %v246
    %v248 = vpop.f32.mrb[0].mxu0
    %249 = vmatprep.mubr.f32.mxu0 0.0
    %250 = vmatmul.mubr.f32.gmra.mrb[0].mxu0 %v104
    %v251 = vpop.f32.mrb[0].mxu0
    %v252 = vadd.f32 %v75, %v251
    %v253 = vpop.f32.mrb[0].mxu0
    %254 = vmatprep.mubr.f32.mxu0 0.0
    %255 = vmatmul.mubr.f32.gmra.mrb[0].mxu0 %v107
    %v256 = vpop.f32.mrb[0].mxu0
    %v257 = vadd.f32 %v80, %v256
    %v258 = vpop.f32.mrb[0].mxu0
    %259 = vmatprep.mubr.f32.mxu0 0.0
    %260 = vmatmul.mubr.f32.gmra.mrb[0].mxu0 %v110
    %v261 = vpop.f32.mrb[0].mxu0
    %v262 = vadd.f32 %v85, %v261
    %v263 = vpop.f32.mrb[0].mxu0
    %264 = vdwg.mxu0
    %v265 = vmax.f32 %v227, 0.0
    %v266 = vmax.f32 %v232, 0.0
    %v267 = vmax.f32 %v237, 0.0
    %v268 = vmax.f32 %v242, 0.0
    %v269 = vmax.f32 %v247, 0.0
    %v270 = vmax.f32 %v252, 0.0
    %v271 = vmax.f32 %v257, 0.0
    %v272 = vmax.f32 %v262, 0.0
    %v273 = vld [vmem:[%s1 + $0x40] sm:$0xff]
    %v274 = vld [vmem:[%s1 + $0x48] sm:$0xff]
    %v275 = vld [vmem:[%s1 + $0x50] sm:$0xff]
    %v276 = vld [vmem:[%s1 + $0x58] sm:$0xff]
    %v277 = vld [vmem:[%s2 + $0x40] sm:$0xff]
    %v278 = vld [vmem:[%s2 + $0x48] sm:$0xff]
    %v279 = vld [vmem:[%s2 + $0x50] sm:$0xff]
    %v280 = vld [vmem:[%s2 + $0x58] sm:$0xff]
    %282 = vset.pattern.permute.xlu0 0
    %283 = vperm.xlu0 %282, %v277
    %v284 = vpop.permute.xlu0 %283
    %287 = vset.pattern.permute.xlu0 0
    %288 = vperm.xlu0 %287, %v278
    %v289 = vpop.permute.xlu0 %288
    %292 = vset.pattern.permute.xlu0 0
    %293 = vperm.xlu0 %292, %v279
    %v294 = vpop.permute.xlu0 %293
    %297 = vset.pattern.permute.xlu0 0
    %298 = vperm.xlu0 %297, %v280
    %v299 = vpop.permute.xlu0 %298
    %vm301 = vcmask 523264
    %v303 = vsel %vm301, %v273, 0
    %v306 = vsel %vm301, %v274, 0
    %v309 = vsel %vm301, %v275, 0
    %v312 = vsel %vm301, %v276, 0
    %314 = vmatprep.subr.mxu0 0.0
    %315 = vmatpush1.msra.mxu0 %v265
    %316 = vmatprep.subr.mxu0 0.0
    %317 = vmatpush1.msra.mxu0 %v266
    %318 = vmatprep.subr.mxu0 0.0
    %319 = vmatpush1.msra.mxu0 %v267
    %320 = vmatprep.subr.mxu0 0.0
    %321 = vmatpush1.msra.mxu0 %v268
    %322 = vmatprep.subr.mxu0 0.0
    %323 = vmatpush1.msra.mxu0 %v269
    %324 = vmatprep.subr.mxu0 0.0
    %325 = vmatpush1.msra.mxu0 %v270
    %326 = vmatprep.subr.mxu0 0.0
    %327 = vmatpush1.msra.mxu0 %v271
    %328 = vmatprep.subr.mxu0 0.0
    %329 = vmatpush1.msra.mxu0 %v272
    %330 = vmatprep.subr.mxu0 0.0
    %331 = vmatpush1.msra.mxu0 0.0
    %332 = vmatprep.subr.mxu0 0.0
    %333 = vmatpush1.msra.mxu0 0.0
    %334 = vmatprep.subr.mxu0 0.0
    %335 = vmatpush1.msra.mxu0 0.0
    %336 = vmatprep.subr.mxu0 0.0
    %337 = vmatpush1.msra.mxu0 0.0
    %338 = vmatprep.subr.mxu0 0.0
    %339 = vmatpush1.msra.mxu0 0.0
    %340 = vmatprep.subr.mxu0 0.0
    %341 = vmatpush1.msra.mxu0 0.0
    %342 = vmatprep.subr.mxu0 0.0
    %343 = vmatpush1.msra.mxu0 0.0
    %344 = vmatprep.subr.mxu0 0.0
    %345 = vmatpush1.msra.mxu0 0.0
    %346 = vmatprep.subr.mxu0 0.0
    %347 = vmatpush1.msra.mxu0 0.0
    %348 = vmatprep.subr.mxu0 0.0
    %349 = vmatpush1.msra.mxu0 0.0
    %350 = vmatprep.subr.mxu0 0.0
    %351 = vmatpush1.msra.mxu0 0.0
    %352 = vmatprep.subr.mxu0 0.0
    %353 = vmatpush1.msra.mxu0 0.0
    %354 = vmatprep.subr.mxu0 0.0
    %355 = vmatpush1.msra.mxu0 0.0
    %356 = vmatprep.subr.mxu0 0.0
    %357 = vmatpush1.msra.mxu0 0.0
    %358 = vmatprep.subr.mxu0 0.0
    %359 = vmatpush1.msra.mxu0 0.0
    %360 = vmatprep.subr.mxu0 0.0
    %361 = vmatpush1.msra.mxu0 0.0
    %362 = vmatprep.subr.mxu0 0.0
    %363 = vmatpush1.msra.mxu0 0.0
    %364 = vmatprep.subr.mxu0 0.0
    %365 = vmatpush1.msra.mxu0 0.0
    %366 = vmatprep.subr.mxu0 0.0
    %367 = vmatpush1.msra.mxu0 0.0
    %368 = vmatprep.subr.mxu0 0.0
    %369 = vmatpush1.msra.mxu0 0.0
    %370 = vmatprep.subr.mxu0 0.0
    %371 = vmatpush1.msra.mxu0 0.0
    %372 = vmatprep.subr.mxu0 0.0
    %373 = vmatpush1.msra.mxu0 0.0
    %374 = vmatprep.subr.mxu0 0.0
    %375 = vmatpush1.msra.mxu0 0.0
    %376 = vmatprep.subr.mxu0 0.0
    %377 = vmatpush1.msra.mxu0 0.0
    %378 = vmatprep.mubr.f32.mxu0 0.0
    %379 = vmatmul.mubr.f32.gmra.mrb[0].mxu0 %v303
    %v380 = vpop.f32.mrb[0].mxu0
    %v381 = vadd.f32 %v284, %v380
    %v382 = vpop.f32.mrb[0].mxu0
    %383 = vmatprep.mubr.f32.mxu0 0.0
    %384 = vmatmul.mubr.f32.gmra.mrb[0].mxu0 %v306
    %v385 = vpop.f32.mrb[0].mxu0
    %v386 = vadd.f32 %v289, %v385
    %v387 = vpop.f32.mrb[0].mxu0
    %388 = vmatprep.mubr.f32.mxu0 0.0
    %389 = vmatmul.mubr.f32.gmra.mrb[0].mxu0 %v309
    %v390 = vpop.f32.mrb[0].mxu0
    %v391 = vadd.f32 %v294, %v390
    %v392 = vpop.f32.mrb[0].mxu0
    %393 = vmatprep.mubr.f32.mxu0 0.0
    %394 = vmatmul.mubr.f32.gmra.mrb[0].mxu0 %v312
    %v395 = vpop.f32.mrb[0].mxu0
    %v396 = vadd.f32 %v299, %v395
    %v397 = vpop.f32.mrb[0].mxu0
    %398 = vdwg.mxu0
    %v399 = vmax.f32 %v381, 0.0
    %v400 = vmax.f32 %v386, 0.0
    %v401 = vmax.f32 %v391, 0.0
    %v402 = vmax.f32 %v396, 0.0
    %v403 = vld [vmem:[%s1 + $0x60] sm:$0x1]
    %v404 = vld [vmem:[%s2 + $0x60] sm:$0x1]
    %406 = vset.pattern.permute.xlu0 0
    %407 = vperm.xlu0 %406, %v404
    %v408 = vpop.permute.xlu0 %407
    %vm410 = vcmask 261120
    %v412 = vsel %vm410, %v403, 0
    %414 = vmatprep.subr.mxu0 0.0
    %415 = vmatpush1.msra.mxu0 %v399
    %416 = vmatprep.subr.mxu0 0.0
    %417 = vmatpush1.msra.mxu0 %v400
    %418 = vmatprep.subr.mxu0 0.0
    %419 = vmatpush1.msra.mxu0 %v401
    %420 = vmatprep.subr.mxu0 0.0
    %421 = vmatpush1.msra.mxu0 %v402
    %422 = vmatprep.subr.mxu0 0.0
    %423 = vmatpush1.msra.mxu0 0.0
    %424 = vmatprep.subr.mxu0 0.0
    %425 = vmatpush1.msra.mxu0 0.0
    %426 = vmatprep.subr.mxu0 0.0
    %427 = vmatpush1.msra.mxu0 0.0
    %428 = vmatprep.subr.mxu0 0.0
    %429 = vmatpush1.msra.mxu0 0.0
    %430 = vmatprep.subr.mxu0 0.0
    %431 = vmatpush1.msra.mxu0 0.0
    %432 = vmatprep.subr.mxu0 0.0
    %433 = vmatpush1.msra.mxu0 0.0
    %434 = vmatprep.subr.mxu0 0.0
    %435 = vmatpush1.msra.mxu0 0.0
    %436 = vmatprep.subr.mxu0 0.0
    %437 = vmatpush1.msra.mxu0 0.0
    %438 = vmatprep.subr.mxu0 0.0
    %439 = vmatpush1.msra.mxu0 0.0
    %440 = vmatprep.subr.mxu0 0.0
    %441 = vmatpush1.msra.mxu0 0.0
    %442 = vmatprep.subr.mxu0 0.0
    %443 = vmatpush1.msra.mxu0 0.0
    %444 = vmatprep.subr.mxu0 0.0
    %445 = vmatpush1.msra.mxu0 0.0
    %446 = vmatprep.subr.mxu0 0.0
    %447 = vmatpush1.msra.mxu0 0.0
    %448 = vmatprep.subr.mxu0 0.0
    %449 = vmatpush1.msra.mxu0 0.0
    %450 = vmatprep.subr.mxu0 0.0
    %451 = vmatpush1.msra.mxu0 0.0
    %452 = vmatprep.subr.mxu0 0.0
    %453 = vmatpush1.msra.mxu0 0.0
    %454 = vmatprep.subr.mxu0 0.0
    %455 = vmatpush1.msra.mxu0 0.0
    %456 = vmatprep.subr.mxu0 0.0
    %457 = vmatpush1.msra.mxu0 0.0
    %458 = vmatprep.subr.mxu0 0.0
    %459 = vmatpush1.msra.mxu0 0.0
    %460 = vmatprep.subr.mxu0 0.0
    %461 = vmatpush1.msra.mxu0 0.0
    %462 = vmatprep.subr.mxu0 0.0
    %463 = vmatpush1.msra.mxu0 0.0
    %464 = vmatprep.subr.mxu0 0.0
    %465 = vmatpush1.msra.mxu0 0.0
    %466 = vmatprep.subr.mxu0 0.0
    %467 = vmatpush1.msra.mxu0 0.0
    %468 = vmatprep.subr.mxu0 0.0
    %469 = vmatpush1.msra.mxu0 0.0
    %470 = vmatprep.subr.mxu0 0.0
    %471 = vmatpush1.msra.mxu0 0.0
    %472 = vmatprep.subr.mxu0 0.0
    %473 = vmatpush1.msra.mxu0 0.0
    %474 = vmatprep.subr.mxu0 0.0
    %475 = vmatpush1.msra.mxu0 0.0
    %476 = vmatprep.subr.mxu0 0.0
    %477 = vmatpush1.msra.mxu0 0.0
    %478 = vmatprep.mubr.f32.mxu0 0.0
    %479 = vmatmul.mubr.f32.gmra.mrb[0].mxu0 %v412
    %v480 = vpop.f32.mrb[0].mxu0
    %v481 = vadd.f32 %v408, %v480
    %v482 = vpop.f32.mrb[0].mxu0
    %483 = vdwg.mxu0
    %484 = vst [vmem:[#allocation2] sm:$0x1] %v481
    // Predicated region
    $region14: #{tpu_custom_call.1} parent=1 // pred_check
      _
    $region15: #{tpu_custom_call.1} parent=1 // pred_check_branch
      %486 = sbr.rel (0) target = $region17
    $region16: #{tpu_custom_call.1} parent=1 // pred_region
      %s488 = ssub.s32 16, 16
      %489 = vsyncadd [#allocation3], %s488
      %s491 = sshll.u32 [#allocation2], 4
      %s492 = int_to_ptr.vmem [resolvable:$true] %s491
      %494 = dma.vmem_to_hbm [thread:$0]  %s492, 16, %s3, [#allocation3]
    $region17: #{tpu_custom_call.1} parent=1 // pred_fallthru
      _
    // Predicated region
    $region18: #{tpu_custom_call.1} parent=1 // pred_check
      _
    $region19: #{tpu_custom_call.1} parent=1 // pred_check_branch
      %496 = sbr.rel (0) target = $region21
    $region20: #{tpu_custom_call.1} parent=1 // pred_region
      %497 = dma.done [#allocation3], 16
    $region21: #{tpu_custom_call.1} parent=1 // pred_fallthru
      _
    %498 = vsyncpa [#allocation3], 1

</llo_original>
